<compile_context>
chip_gen: v6e
topology: v6e:2x2x1
jax: 0.10.0
libtpu: 0.0.40
codegen_flags: <defaults>
</compile_context>

<pallas_src>
import functools
import math

import jax
import jax.numpy as jnp
from jax import lax
from jax.experimental import pallas as pl
from jax.experimental.pallas import tpu as pltpu


def _round_up(x, m):
    return ((x + m - 1) // m) * m


def _tpu_generation():
    try:
        kind = jax.devices()[0].device_kind.lower()
    except Exception:
        return 0
    for g in (7, 6, 5, 4):
        if str(g) in kind:
            return g
    return 0


_GEN = _tpu_generation()

# ~2 MiB (f32-equivalent) blocks: long DMAs, per-grid-step overhead amortized.
_TARGET_TILE_BYTES = 2 * 1024 * 1024
# v5e/v6e: 128 MiB physical VMEM, scoped default is only 16/32 MiB -> raise.
# v7x: only 64 MiB physical -> lower cap, leave headroom for compiler scratch.
_VMEM_LIMIT_BYTES = (40 if _GEN >= 7 else 48) * 1024 * 1024


def _compiler_params(n_grid_dims):
    return pltpu.CompilerParams(
        dimension_semantics=("parallel",) * n_grid_dims,
        vmem_limit_bytes=_VMEM_LIMIT_BYTES,
    )


def _sublane_multiple(dtype):
    # f32 -> 8 sublanes, bf16 -> 16 (packed), int8/fp8 -> 32
    return 8 * (4 // jnp.dtype(dtype).itemsize)


# --------------------------------------------------------------------------
# Kernels
# --------------------------------------------------------------------------

def _ln_rows_kernel(x_ref, w_ref, b_ref, o_ref, *, eps):
    """x_ref: (tm, C); normalize each row over the lane axis C."""
    x = x_ref[...].astype(jnp.float32)
    mean = jnp.mean(x, axis=-1, keepdims=True)
    xc = x - mean
    var = jnp.mean(xc * xc, axis=-1, keepdims=True)
    inv = lax.rsqrt(var + eps)
    y = xc * inv * w_ref[...] + b_ref[...]
    o_ref[...] = y.astype(o_ref.dtype)


def _ln_packed_kernel(x_ref, seg_ref, w_ref, b_ref, o_ref, *, eps, inv_c):
    """Lane-dense path for C | 128: each 128-lane row packs 128//C logical rows.

    Per-logical-row sums are segmented lane reductions done as a matmul with a
    block-diagonal {0,1} matrix `seg` (exact in bf16, VMEM-resident across the
    grid).  x is split into three bf16 terms, so each segmented sum costs 3
    single-pass bf16 matmuls (vs ~6 passes for a HIGHEST f32xf32 dot) while
    remaining f32-accurate (~2^-27 residual).
    """
    x = x_ref[...].astype(jnp.float32)
    seg = seg_ref[...]                                   # (128, 128) bf16

    def seg_sum(v):
        hi = v.astype(jnp.bfloat16)
        r1 = v - hi.astype(jnp.float32)
        mid = r1.astype(jnp.bfloat16)
        lo = (r1 - mid.astype(jnp.float32)).astype(jnp.bfloat16)
        acc = jnp.dot(hi, seg, preferred_element_type=jnp.float32)
        acc = acc + jnp.dot(mid, seg, preferred_element_type=jnp.float32)
        acc = acc + jnp.dot(lo, seg, preferred_element_type=jnp.float32)
        return acc

    mean = seg_sum(x) * inv_c
    xc = x - mean
    var = seg_sum(xc * xc) * inv_c
    inv = lax.rsqrt(var + eps)
    y = xc * inv * w_ref[...] + b_ref[...]
    o_ref[...] = y.astype(o_ref.dtype)


def _ln_cf_kernel(x_ref, w_ref, b_ref, o_ref, *, eps):
    """channels_first: x_ref (bn, C, tl); reduce over the channel (sublane) axis."""
    x = x_ref[...].astype(jnp.float32)
    mean = jnp.mean(x, axis=1, keepdims=True)
    xc = x - mean
    var = jnp.mean(xc * xc, axis=1, keepdims=True)
    inv = lax.rsqrt(var + eps)
    y = xc * inv * w_ref[...] + b_ref[...]
    o_ref[...] = y.astype(o_ref.dtype)


# --------------------------------------------------------------------------
# Wrappers
# --------------------------------------------------------------------------

def _layernorm_rows(x2d, weight, bias, eps):
    """x2d: (R, C); normalize each row over C.  No pads, no output slices."""
    R, C = x2d.shape
    dtype = x2d.dtype
    sub = _sublane_multiple(dtype)
    w = weight.astype(jnp.float32).reshape(1, C)
    b = bias.astype(jnp.float32).reshape(1, C)

    if C < 128 and 128 % C == 0 and R % (128 // C) == 0:
        # Lane-dense packed path (reshape of a contiguous array is free).
        k = 128 // C
        Rp = R // k
        xp = x2d.reshape(Rp, 128)
        tm_cap = max(sub, (_TARGET_TILE_BYTES // (128 * 4)) // sub * sub)
        tm = Rp if Rp <= tm_cap else tm_cap
        grid = pl.cdiv(Rp, tm)

        lane = jnp.arange(128, dtype=jnp.int32)
        seg = ((lane[:, None] // C) == (lane[None, :] // C)).astype(jnp.bfloat16)
        wp = jnp.tile(w, (1, k))
        bp = jnp.tile(b, (1, k))

        yp = pl.pallas_call(
            functools.partial(_ln_packed_kernel, eps=eps, inv_c=1.0 / C),
            out_shape=jax.ShapeDtypeStruct((Rp, 128), dtype),
            grid_spec=pltpu.PrefetchScalarGridSpec(
                num_scalar_prefetch=0,
                grid=(grid,),
                in_specs=[
                    pl.BlockSpec((tm, 128), lambda i: (i, 0)),
                    pl.BlockSpec((128, 128), lambda i: (0, 0)),   # seg: resident
                    pl.BlockSpec((1, 128), lambda i: (0, 0)),
                    pl.BlockSpec((1, 128), lambda i: (0, 0)),
                ],
                out_specs=pl.BlockSpec((tm, 128), lambda i: (i, 0)),
            ),
            compiler_params=_compiler_params(1),
        )(xp, seg, wp, bp)
        return yp.reshape(R, C)

    # General path: (tm, C) row tiles, reduce over lanes.
    tm_cap = max(sub, (_TARGET_TILE_BYTES // (C * 4)) // sub * sub)
    tm = R if R <= tm_cap else tm_cap
    grid = pl.cdiv(R, tm)
    return pl.pallas_call(
        functools.partial(_ln_rows_kernel, eps=eps),
        out_shape=jax.ShapeDtypeStruct((R, C), dtype),
        grid_spec=pltpu.PrefetchScalarGridSpec(
            num_scalar_prefetch=0,
            grid=(grid,),
            in_specs=[
                pl.BlockSpec((tm, C), lambda i: (i, 0)),
                pl.BlockSpec((1, C), lambda i: (0, 0)),
                pl.BlockSpec((1, C), lambda i: (0, 0)),
            ],
            out_specs=pl.BlockSpec((tm, C), lambda i: (i, 0)),
        ),
        compiler_params=_compiler_params(1),
    )(x2d, w, b)


def _layernorm_channels_first(x, weight, bias, eps):
    """NCHW(+) input; normalize over dim 1.  Channels on sublanes, spatial on
    lanes -> no wrapper transposes, no pads, no output slices."""
    N, C = x.shape[0], x.shape[1]
    HW = math.prod(x.shape[2:]) if x.ndim > 2 else 1
    dtype = x.dtype
    x3 = x.reshape(N, C, HW)
    w3 = weight.astype(jnp.float32).reshape(1, C, 1)
    b3 = bias.astype(jnp.float32).reshape(1, C, 1)

    # Tile sizing in f32-equivalent bytes, accounting for (8, 128) layout pad.
    c_pad = _round_up(C, 8)
    tl_cap = max(128, (_TARGET_TILE_BYTES // (c_pad * 4)) // 128 * 128)
    if HW <= tl_cap:
        tl = HW
    else:
        tl = tl_cap
    n_l = pl.cdiv(HW, tl)

    # When one sample's (C, tl) tile is far below the target, block over batch
    # too (ConvNeXt late stages: HW = 49/196 would otherwise give ~100 KB tiles).
    tile_bytes = c_pad * _round_up(tl, 128) * 4
    bn_cap = max(1, _TARGET_TILE_BYTES // tile_bytes)
    bn = N if N <= bn_cap else bn_cap
    n_n = pl.cdiv(N, bn)

    y3 = pl.pallas_call(
        functools.partial(_ln_cf_kernel, eps=eps),
        out_shape=jax.ShapeDtypeStruct((N, C, HW), dtype),
        grid_spec=pltpu.PrefetchScalarGridSpec(
            num_scalar_prefetch=0,
            grid=(n_n, n_l),
            in_specs=[
                pl.BlockSpec((bn, C, tl), lambda n, l: (n, 0, l)),
                pl.BlockSpec((1, C, 1), lambda n, l: (0, 0, 0)),
                pl.BlockSpec((1, C, 1), lambda n, l: (0, 0, 0)),
            ],
            out_specs=pl.BlockSpec((bn, C, tl), lambda n, l: (n, 0, l)),
        ),
        compiler_params=_compiler_params(2),
    )(x3, w3, b3)
    return y3.reshape(x.shape)


def layer_norm(x, weight, bias, eps=1e-6, data_format="channels_last"):
    """ConvNeXt LayerNorm (forward)."""
    if data_format not in ("channels_last", "channels_first"):
        raise NotImplementedError
    if data_format == "channels_last":
        C = x.shape[-1]
        lead = x.shape[:-1]
        y2d = _layernorm_rows(x.reshape(-1, C), weight, bias, eps)
        return y2d.reshape(*lead, C)
    return _layernorm_channels_first(x, weight, bias, eps)


# --------------------------------------------------------------------------
# Reference + demo
# --------------------------------------------------------------------------

def _ref_layer_norm(x, weight, bias, eps, data_format):
    if data_format == "channels_last":
        u = jnp.mean(x, axis=-1, keepdims=True)
        s = jnp.mean((x - u) ** 2, axis=-1, keepdims=True)
        return (x - u) / jnp.sqrt(s + eps) * weight + bias
    u = jnp.mean(x, axis=1, keepdims=True)
    s = jnp.mean((x - u) ** 2, axis=1, keepdims=True)
    xn = (x - u) / jnp.sqrt(s + eps)
    pshape = (1, -1) + (1,) * (x.ndim - 2)
    return weight.reshape(pshape) * xn + bias.reshape(pshape)


def _check(name, y, ref):
    jax.block_until_ready(y)
    assert jnp.allclose(y, ref, atol=1e-5, rtol=1e-5), f"{name} mismatch"


if __name__ == "__main__":
    key = jax.random.PRNGKey(0)
    keys = jax.random.split(key, 12)
    eps = 1e-6

    def params(k, c):
        kw, kb = jax.random.split(k)
        w = 1.0 + 0.1 * jax.random.normal(kw, (c,), jnp.float32)
        b = 0.1 * jax.random.normal(kb, (c,), jnp.float32)
        return w, b

    # 1) channels_first NCHW, C=32 (sublane-reduce kernel, batch-blocked tiles)
    C = 32
    w1, b1 = params(keys[0], C)
    x_cf = jax.random.normal(keys[1], (2, C, 8, 8), jnp.float32)
    y_cf = layer_norm(x_cf, w1, b1, eps, data_format="channels_first")
    _check("channels_first", y_cf, _ref_layer_norm(x_cf, w1, b1, eps, "channels_first"))

    # 2) channels_last (..., 32): lane-dense packed kernel (128 % 32 == 0)
    x_cl = jax.random.normal(keys[2], (2, 8, 8, C), jnp.float32)
    y_cl = layer_norm(x_cl, w1, b1, eps, data_format="channels_last")
    _check("channels_last C=32", y_cl, _ref_layer_norm(x_cl, w1, b1, eps, "channels_last"))

    # 3) channels_last C=96, small ragged row count (general row kernel)
    C2 = 96
    w2, b2 = params(keys[3], C2)
    x2 = jax.random.normal(keys[4], (3, 7, C2), jnp.float32)
    y2 = layer_norm(x2, w2, b2, eps, data_format="channels_last")
    _check("channels_last C=96", y2, _ref_layer_norm(x2, w2, b2, eps, "channels_last"))

    # 4) channels_last C=512: multi-step grid with a ragged final row block
    C3 = 512
    w3, b3 = params(keys[5], C3)
    x3 = jax.random.normal(keys[6], (1100, C3), jnp.float32)
    y3 = layer_norm(x3, w3, b3, eps, data_format="channels_last")
    _check("channels_last C=512 ragged", y3, _ref_layer_norm(x3, w3, b3, eps, "channels_last"))

    # 5) channels_last C=64: packed path with a ragged final block
    C4 = 64
    w4, b4 = params(keys[7], C4)
    x4 = jax.random.normal(keys[8], (8200, C4), jnp.float32)
    y4 = layer_norm(x4, w4, b4, eps, data_format="channels_last")
    _check("channels_last C=64 packed ragged", y4,
           _ref_layer_norm(x4, w4, b4, eps, "channels_last"))

    print("KERNEL_OK")
</pallas_src>

<mosaic_0001>
module attributes {stable_mosaic.version = 11 : i64} {
  func.func @_ln_cf_kernel(%arg0: i32, %arg1: i32, %arg2: memref<2x32x64xf32, #tpu.memory_space<vmem>>, %arg3: memref<1x32x1xf32, #tpu.memory_space<vmem>>, %arg4: memref<1x32x1xf32, #tpu.memory_space<vmem>>, %arg5: memref<2x32x64xf32, #tpu.memory_space<vmem>>) attributes {dimension_semantics = [#tpu.dimension_semantics<parallel>, #tpu.dimension_semantics<parallel>], iteration_bounds = array<i64: 1, 1>, scalar_prefetch = 0 : i64, scratch_operands = 0 : i64, tpu.core_type = #tpu.core_type<tc>, window_params = [{transform_indices = @transform_0, window_bounds = array<i64: 2, 32, 64>}, {pipeline_mode = #tpu.pipeline_mode<synchronous>, transform_indices = @transform_1, window_bounds = array<i64: 1, 32, 1>}, {pipeline_mode = #tpu.pipeline_mode<synchronous>, transform_indices = @transform_2, window_bounds = array<i64: 1, 32, 1>}, {transform_indices = @transform_3, window_bounds = array<i64: 2, 32, 64>}]} {
    %c0 = arith.constant 0 : index
    %c0_0 = arith.constant 0 : index
    %c0_1 = arith.constant 0 : index
    %0 = vector.load %arg2[%c0, %c0_0, %c0_1] : memref<2x32x64xf32, #tpu.memory_space<vmem>>, vector<2x32x64xf32>
    %cst = arith.constant dense<0.000000e+00> : vector<2x64xf32>
    %1 = vector.multi_reduction <add>, %0, %cst [1] : vector<2x32x64xf32> to vector<2x64xf32>
    %2 = vector.shape_cast %1 : vector<2x64xf32> to vector<2x1x64xf32>
    %cst_2 = arith.constant 3.200000e+01 : f32
    %3 = vector.broadcast %cst_2 : f32 to vector<2x1x64xf32>
    %4 = arith.divf %2, %3 : vector<2x1x64xf32>
    %5 = vector.broadcast %4 : vector<2x1x64xf32> to vector<2x32x64xf32>
    %6 = arith.subf %0, %5 : vector<2x32x64xf32>
    %7 = arith.mulf %6, %6 : vector<2x32x64xf32>
    %cst_3 = arith.constant dense<0.000000e+00> : vector<2x64xf32>
    %8 = vector.multi_reduction <add>, %7, %cst_3 [1] : vector<2x32x64xf32> to vector<2x64xf32>
    %9 = vector.shape_cast %8 : vector<2x64xf32> to vector<2x1x64xf32>
    %cst_4 = arith.constant 3.200000e+01 : f32
    %10 = vector.broadcast %cst_4 : f32 to vector<2x1x64xf32>
    %11 = arith.divf %9, %10 : vector<2x1x64xf32>
    %cst_5 = arith.constant 9.99999997E-7 : f32
    %12 = vector.broadcast %cst_5 : f32 to vector<2x1x64xf32>
    %13 = arith.addf %11, %12 : vector<2x1x64xf32>
    %14 = math.rsqrt %13 : vector<2x1x64xf32>
    %15 = vector.broadcast %14 : vector<2x1x64xf32> to vector<2x32x64xf32>
    %16 = arith.mulf %6, %15 : vector<2x32x64xf32>
    %c0_6 = arith.constant 0 : index
    %c0_7 = arith.constant 0 : index
    %c0_8 = arith.constant 0 : index
    %17 = vector.load %arg3[%c0_6, %c0_7, %c0_8] : memref<1x32x1xf32, #tpu.memory_space<vmem>>, vector<1x32x1xf32>
    %18 = vector.broadcast %17 : vector<1x32x1xf32> to vector<2x32x64xf32>
    %19 = arith.mulf %16, %18 : vector<2x32x64xf32>
    %c0_9 = arith.constant 0 : index
    %c0_10 = arith.constant 0 : index
    %c0_11 = arith.constant 0 : index
    %20 = vector.load %arg4[%c0_9, %c0_10, %c0_11] : memref<1x32x1xf32, #tpu.memory_space<vmem>>, vector<1x32x1xf32>
    %21 = vector.broadcast %20 : vector<1x32x1xf32> to vector<2x32x64xf32>
    %22 = arith.addf %19, %21 : vector<2x32x64xf32>
    %c0_12 = arith.constant 0 : index
    %c0_13 = arith.constant 0 : index
    %c0_14 = arith.constant 0 : index
    %23 = vector.load %arg5[%c0_12, %c0_13, %c0_14] : memref<2x32x64xf32, #tpu.memory_space<vmem>>, vector<2x32x64xf32>
    tpu.vector_store %arg5[%c0_12, %c0_13, %c0_14], %22 {strides = array<i32>} : memref<2x32x64xf32, #tpu.memory_space<vmem>>, vector<2x32x64xf32>,
    return
  }
  func.func @transform_0(%arg0: i32, %arg1: i32) -> (i32, i32, i32) {
    %c0_i32 = arith.constant 0 : i32
    %c0_i32_0 = arith.constant 0 : i32
    return %arg0, %c0_i32, %arg1 : i32, i32, i32
  }
  func.func @transform_1(%arg0: i32, %arg1: i32) -> (i32, i32, i32) {
    %c0_i32 = arith.constant 0 : i32
    %c0_i32_0 = arith.constant 0 : i32
    %c0_i32_1 = arith.constant 0 : i32
    %c0_i32_2 = arith.constant 0 : i32
    return %c0_i32, %c0_i32_0, %c0_i32_1 : i32, i32, i32
  }
  func.func @transform_2(%arg0: i32, %arg1: i32) -> (i32, i32, i32) {
    %c0_i32 = arith.constant 0 : i32
    %c0_i32_0 = arith.constant 0 : i32
    %c0_i32_1 = arith.constant 0 : i32
    %c0_i32_2 = arith.constant 0 : i32
    return %c0_i32, %c0_i32_0, %c0_i32_1 : i32, i32, i32
  }
  func.func @transform_3(%arg0: i32, %arg1: i32) -> (i32, i32, i32) {
    %c0_i32 = arith.constant 0 : i32
    %c0_i32_0 = arith.constant 0 : i32
    return %arg0, %c0_i32, %arg1 : i32, i32, i32
  }
}

</mosaic_0001>

<llo_original>
// kernel: tpu_custom_call.1
$region0: #{tpu_custom_call.1}
  #allocation0 [shape = 'u32[]', space=smem, size = 0x4, offset = 0x4, fixed_abs, tag = 'smem constant byte address 0x4 - core index']
  #allocation1 [shape = 'u32[144,128]{1,0:T(1,128)}', space=vmem, size = 0x12000, scoped, tag = 'internal scratch']
  %s0 = inlined_call_operand.vmem [shape: f32[2,32,64], index: 0, kind: input, shape index: {}]
  %s1 = inlined_call_operand.vmem [shape: f32[1,32,1], index: 1, kind: input, shape index: {}]
  %s2 = inlined_call_operand.vmem [shape: f32[1,32,1], index: 2, kind: input, shape index: {}]
  %s3 = inlined_call_operand.hbm [shape: f32[2,32,64], index: 3, kind: output, shape index: {}]
  %s4 = sld [smem:[#allocation0]]
  $region22: #{tpu_custom_call.1} parent=0
    _
  %s6 = ssub.s32 1, %s4
  %s7 = scalar_select 0, %s6, %s4
  $region1: #{tpu_custom_call.1} parent=0
    #allocation2 [shape = 'u8[32768]{0}', space=vmem, size = 0x8000, scoped, tag = 'output window, operand 0, single buffered']
    #allocation3 [shape = 's32[1]{0}', space=sflag, size = 0x4, scoped, tag = 'scoped memory for tpu_custom_call.1']
    %8 = vsyncpa [#allocation3], 0
    // Predicated region
    $region2: #{tpu_custom_call.1} parent=1 // pred_check
      _
    $region3: #{tpu_custom_call.1} parent=1 // pred_check_branch
      %10 = sbr.rel (0) target = $region5
    $region4: #{tpu_custom_call.1} parent=1 // pred_region
      _
    $region5: #{tpu_custom_call.1} parent=1 // pred_fallthru
      _
    // Predicated region
    $region6: #{tpu_custom_call.1} parent=1 // pred_check
      _
    $region7: #{tpu_custom_call.1} parent=1 // pred_check_branch
      %12 = sbr.rel (0) target = $region9
    $region8: #{tpu_custom_call.1} parent=1 // pred_region
      _
    $region9: #{tpu_custom_call.1} parent=1 // pred_fallthru
      _
    // Predicated region
    $region10: #{tpu_custom_call.1} parent=1 // pred_check
      _
    $region11: #{tpu_custom_call.1} parent=1 // pred_check_branch
      %14 = sbr.rel (0) target = $region13
    $region12: #{tpu_custom_call.1} parent=1 // pred_region
      _
    $region13: #{tpu_custom_call.1} parent=1 // pred_fallthru
      _
    %v15 = vld [vmem:[%s0] sm:$0xff]
    %v16 = vld [vmem:[%s0 + $0x8] sm:$0xff]
    %v17 = vld [vmem:[%s0 + $0x10] sm:$0xff]
    %v18 = vld [vmem:[%s0 + $0x18] sm:$0xff]
    %v19 = vld [vmem:[%s0 + $0x20] sm:$0xff]
    %v20 = vld [vmem:[%s0 + $0x28] sm:$0xff]
    %v21 = vld [vmem:[%s0 + $0x30] sm:$0xff]
    %v22 = vld [vmem:[%s0 + $0x38] sm:$0xff]
    %vm23 = vcmask 523264
    %v24 = vsel %vm23, %v15, 0.0
    %v25 = vsel %vm23, %v16, 0.0
    %v26 = vadd.f32 %v24, %v25
    %v27 = vsel %vm23, %v17, 0.0
    %v28 = vadd.f32 %v26, %v27
    %v29 = vsel %vm23, %v18, 0.0
    %v30 = vadd.f32 %v28, %v29
    %v31 = vrot.slane %v30, 4
    %v32 = vadd.f32 %v30, %v31
    %v33 = vrot.slane %v32, 2
    %v34 = vadd.f32 %v32, %v33
    %v35 = vrot.slane %v34, 1
    %v36 = vadd.f32 %v34, %v35
    %v37 = vsel %vm23, %v19, 0.0
    %v38 = vsel %vm23, %v20, 0.0
    %v39 = vadd.f32 %v37, %v38
    %v40 = vsel %vm23, %v21, 0.0
    %v41 = vadd.f32 %v39, %v40
    %v42 = vsel %vm23, %v22, 0.0
    %v43 = vadd.f32 %v41, %v42
    %v44 = vrot.slane %v43, 4
    %v45 = vadd.f32 %v43, %v44
    %v46 = vrot.slane %v45, 2
    %v47 = vadd.f32 %v45, %v46
    %v48 = vrot.slane %v47, 1
    %v49 = vadd.f32 %v47, %v48
    %v50 = vrcp.pop 32.0
    %v51 = vmul.f32 %v36, %v50
    %v52 = vmul.f32 %v49, %v50
    %v53 = vsub.f32 %v15, %v51
    %v54 = vsub.f32 %v16, %v51
    %v55 = vsub.f32 %v17, %v51
    %v56 = vsub.f32 %v18, %v51
    %v57 = vsub.f32 %v19, %v52
    %v58 = vsub.f32 %v20, %v52
    %v59 = vsub.f32 %v21, %v52
    %v60 = vsub.f32 %v22, %v52
    %v61 = vmul.f32 %v53, %v53
    %v62 = vmul.f32 %v54, %v54
    %v63 = vmul.f32 %v55, %v55
    %v64 = vmul.f32 %v56, %v56
    %v65 = vmul.f32 %v57, %v57
    %v66 = vmul.f32 %v58, %v58
    %v67 = vmul.f32 %v59, %v59
    %v68 = vmul.f32 %v60, %v60
    %v69 = vsel %vm23, %v61, 0.0
    %v70 = vsel %vm23, %v62, 0.0
    %v71 = vadd.f32 %v69, %v70
    %v72 = vsel %vm23, %v63, 0.0
    %v73 = vadd.f32 %v71, %v72
    %v74 = vsel %vm23, %v64, 0.0
    %v75 = vadd.f32 %v73, %v74
    %v76 = vrot.slane %v75, 4
    %v77 = vadd.f32 %v75, %v76
    %v78 = vrot.slane %v77, 2
    %v79 = vadd.f32 %v77, %v78
    %v80 = vrot.slane %v79, 1
    %v81 = vadd.f32 %v79, %v80
    %v82 = vsel %vm23, %v65, 0.0
    %v83 = vsel %vm23, %v66, 0.0
    %v84 = vadd.f32 %v82, %v83
    %v85 = vsel %vm23, %v67, 0.0
    %v86 = vadd.f32 %v84, %v85
    %v87 = vsel %vm23, %v68, 0.0
    %v88 = vadd.f32 %v86, %v87
    %v89 = vrot.slane %v88, 4
    %v90 = vadd.f32 %v88, %v89
    %v91 = vrot.slane %v90, 2
    %v92 = vadd.f32 %v90, %v91
    %v93 = vrot.slane %v92, 1
    %v94 = vadd.f32 %v92, %v93
    %v95 = vmul.f32 %v81, %v50
    %v96 = vmul.f32 %v94, %v50
    %v97 = vadd.f32 %v95, 1e-06
    %v98 = vadd.f32 %v96, 1e-06
    %v99 = vrsqrt.pop %v97
    %v100 = vrsqrt.pop %v98
    %v101 = vmul.f32 %v53, %v99
    %v102 = vmul.f32 %v54, %v99
    %v103 = vmul.f32 %v55, %v99
    %v104 = vmul.f32 %v56, %v99
    %v105 = vmul.f32 %v57, %v100
    %v106 = vmul.f32 %v58, %v100
    %v107 = vmul.f32 %v59, %v100
    %v108 = vmul.f32 %v60, %v100
    %v109 = vld [vmem:[%s1] sm:$0xff]
    %v110 = vld [vmem:[%s1 + $0x8] sm:$0xff]
    %v111 = vld [vmem:[%s1 + $0x10] sm:$0xff]
    %v112 = vld [vmem:[%s1 + $0x18] sm:$0xff]
    %114 = vset.pattern.permute.xlu0 0
    %115 = vperm.xlu0 %114, %v109
    %v116 = vpop.permute.xlu0 %115
    %119 = vset.pattern.permute.xlu0 0
    %120 = vperm.xlu0 %119, %v110
    %v121 = vpop.permute.xlu0 %120
    %124 = vset.pattern.permute.xlu0 0
    %125 = vperm.xlu0 %124, %v111
    %v126 = vpop.permute.xlu0 %125
    %129 = vset.pattern.permute.xlu0 0
    %130 = vperm.xlu0 %129, %v112
    %v131 = vpop.permute.xlu0 %130
    %v133 = vmul.f32 %v101, %v116
    %v134 = vmul.f32 %v102, %v121
    %v135 = vmul.f32 %v103, %v126
    %v136 = vmul.f32 %v104, %v131
    %v137 = vmul.f32 %v105, %v116
    %v138 = vmul.f32 %v106, %v121
    %v139 = vmul.f32 %v107, %v126
    %v140 = vmul.f32 %v108, %v131
    %v141 = vld [vmem:[%s2] sm:$0xff]
    %v142 = vld [vmem:[%s2 + $0x8] sm:$0xff]
    %v143 = vld [vmem:[%s2 + $0x10] sm:$0xff]
    %v144 = vld [vmem:[%s2 + $0x18] sm:$0xff]
    %146 = vset.pattern.permute.xlu0 0
    %147 = vperm.xlu0 %146, %v141
    %v148 = vpop.permute.xlu0 %147
    %151 = vset.pattern.permute.xlu0 0
    %152 = vperm.xlu0 %151, %v142
    %v153 = vpop.permute.xlu0 %152
    %156 = vset.pattern.permute.xlu0 0
    %157 = vperm.xlu0 %156, %v143
    %v158 = vpop.permute.xlu0 %157
    %161 = vset.pattern.permute.xlu0 0
    %162 = vperm.xlu0 %161, %v144
    %v163 = vpop.permute.xlu0 %162
    %v165 = vadd.f32 %v133, %v148
    %v166 = vadd.f32 %v134, %v153
    %v167 = vadd.f32 %v135, %v158
    %v168 = vadd.f32 %v136, %v163
    %v169 = vadd.f32 %v137, %v148
    %v170 = vadd.f32 %v138, %v153
    %v171 = vadd.f32 %v139, %v158
    %v172 = vadd.f32 %v140, %v163
    %173 = vst.msk [vmem:[#allocation2] sm:$0xff] %vm23, %v165
    %174 = vst.msk [vmem:[#allocation2 + $0x8] sm:$0xff] %vm23, %v166
    %175 = vst.msk [vmem:[#allocation2 + $0x10] sm:$0xff] %vm23, %v167
    %176 = vst.msk [vmem:[#allocation2 + $0x18] sm:$0xff] %vm23, %v168
    %177 = vst.msk [vmem:[#allocation2 + $0x20] sm:$0xff] %vm23, %v169
    %178 = vst.msk [vmem:[#allocation2 + $0x28] sm:$0xff] %vm23, %v170
    %179 = vst.msk [vmem:[#allocation2 + $0x30] sm:$0xff] %vm23, %v171
    %180 = vst.msk [vmem:[#allocation2 + $0x38] sm:$0xff] %vm23, %v172
    // Predicated region
    $region14: #{tpu_custom_call.1} parent=1 // pred_check
      _
    $region15: #{tpu_custom_call.1} parent=1 // pred_check_branch
      %182 = sbr.rel (0) target = $region17
    $region16: #{tpu_custom_call.1} parent=1 // pred_region
      %s184 = ssub.s32 1024, 1024
      %185 = vsyncadd [#allocation3], %s184
      %s186 = sshll.u32 [#allocation2], 4
      %s187 = int_to_ptr.vmem [resolvable:$true] %s186
      %192 = dma.vmem_to_hbm [thread:$0]  %s187, 1024, %s3, [#allocation3], 128, 128, 8
    $region17: #{tpu_custom_call.1} parent=1 // pred_fallthru
      _
    // Predicated region
    $region18: #{tpu_custom_call.1} parent=1 // pred_check
      _
    $region19: #{tpu_custom_call.1} parent=1 // pred_check_branch
      %194 = sbr.rel (0) target = $region21
    $region20: #{tpu_custom_call.1} parent=1 // pred_region
      %195 = dma.done [#allocation3], 1024
    $region21: #{tpu_custom_call.1} parent=1 // pred_fallthru
      _
    %196 = vsyncpa [#allocation3], 1

</llo_original>
